<compile_context>
chip_gen: v7x
topology: tpu7x:2x2x1
jax: 0.10.0
libtpu: 0.0.40
codegen_flags: <defaults>
</compile_context>

<pallas_src>
import functools

import jax
import jax.numpy as jnp
from jax import lax
from jax.experimental import pallas as pl
from jax.experimental.pallas import tpu as pltpu

LN_EPS = 1e-12
_GELU_C = 0.7978845608028654  # sqrt(2/pi)


def _gelu_tanh(x):
    # TODO(synk): PyTorch nn.GELU() defaults to the erf formulation; tanh approximation used
    # here (|err| < ~1e-3) because erf has no guaranteed Mosaic lowering.
    return 0.5 * x * (1.0 + jnp.tanh(_GELU_C * (x + 0.044715 * x * x * x)))


def _lm_head_kernel(x_ref, w1_ref, b1_ref, gamma_ref, beta_ref, wd_ref, bd_ref,
                    o_ref, t_ref, *, m_total, bm):
    # Transform is row-tile-only work: compute once per row tile and cache in VMEM scratch.
    @pl.when(pl.program_id(1) == 0)
    def _():
        x = x_ref[...]
        if m_total % bm != 0:
            # Zero the padded rows of the last partial row tile so tanh/rsqrt never see
            # out-of-block garbage (those output rows are masked by Pallas anyway).
            rows = lax.broadcasted_iota(jnp.int32, x.shape, 0) + pl.program_id(0) * bm
            x = jnp.where(rows < m_total, x, jnp.zeros_like(x))
        # Dense: [bm, H] contracted with torch-layout [H_out, H_in] on the 'in' axis -> x @ W1^T.
        y = lax.dot_general(x, w1_ref[...], (((1,), (1,)), ((), ())),
                            preferred_element_type=jnp.float32)
        y = y + b1_ref[...]
        y = _gelu_tanh(y)
        # LayerNorm over the hidden dimension (f32 statistics).
        mean = jnp.mean(y, axis=-1, keepdims=True)
        cen = y - mean
        var = jnp.mean(cen * cen, axis=-1, keepdims=True)
        t = cen * lax.rsqrt(var + LN_EPS)
        t = t * gamma_ref[...] + beta_ref[...]
        t_ref[...] = t.astype(t_ref.dtype)

    # Decoder tile: [bm, H] contracted with [bv, H] on H (bf16 MXU, f32 accumulate) + bias slice.
    scores = lax.dot_general(t_ref[...], wd_ref[...], (((1,), (1,)), ((), ())),
                             preferred_element_type=jnp.float32)
    o_ref[...] = (scores + bd_ref[...]).astype(o_ref.dtype)


def prepare_lm_head_params(w1, emb_w):
    """Cast the two big weight matrices to bf16 ONCE (call at parameter-load time, outside the
    step) so the per-call wrapper does no weight re-materialization.  Layouts stay torch-native
    ([out, in] and [V, H]); the kernel contracts on the trailing H axis, so no transpose either."""
    return w1.astype(jnp.bfloat16), emb_w.astype(jnp.bfloat16)


def _const_spec(shape):
    # Constant-index operands need no double buffer (saves VMEM headroom on v7x).
    try:
        return pl.BlockSpec(shape, lambda i, j: (0, 0), pipeline_mode=pl.Buffered(1))
    except TypeError:  # older BlockSpec without pipeline_mode
        return pl.BlockSpec(shape, lambda i, j: (0, 0))


def lm_prediction_head(x, w1, b1, gamma, beta, emb_w, dec_bias, *,
                       tm=512, tv=1024, out_dtype=jnp.float32):
    """x: [M, H]; w1: [H, H] (torch [out, in]); emb_w: [V, H]; returns [M, V] logits.

    Tile guidance: bm 512-1024 (hides the [bv,H] weight DMA, cuts M/bm re-streams of the
    embedding), bv 1024 (lane-dense; up to 2048 on v6e's 128 MiB VMEM, keep 1024 on v7x's 64 MiB).
    out_dtype=jnp.bfloat16 halves the dominant M*V writeback if downstream allows.
    """
    M, H = x.shape
    V, H2 = emb_w.shape
    assert H == H2

    bm = min(tm, M)
    bv = min(tv, V)
    assert bm == M or bm % 8 == 0, "row tile must be a multiple of 8 (sublane)"
    assert bv == V or bv % 128 == 0, "vocab tile must be a multiple of 128 (lane-dense output)"

    # astype is a no-op when weights were prepared via prepare_lm_head_params.
    x_bf = x.astype(jnp.bfloat16)
    w1_bf = w1.astype(jnp.bfloat16)          # [H, H] torch layout, no transpose
    wd_bf = emb_w.astype(jnp.bfloat16)       # [V, H] native layout, no transpose
    b1_r = b1.reshape(1, H).astype(jnp.float32)
    g_r = gamma.reshape(1, H).astype(jnp.float32)
    be_r = beta.reshape(1, H).astype(jnp.float32)
    bd_r = dec_bias.reshape(1, V).astype(jnp.float32)

    grid_m = pl.cdiv(M, bm)
    grid_v = pl.cdiv(V, bv)
    out_isz = jnp.dtype(out_dtype).itemsize

    # Truthful cost estimate: decoder weight + bias are re-streamed once per row tile.
    flops = 2 * M * H * H + 2 * M * H * V
    bytes_accessed = (M * H * 2 + H * H * 2 + 3 * H * 4
                      + grid_m * (V * H * 2 + V * 4)
                      + M * V * out_isz)
    cost = pl.CostEstimate(flops=flops, transcendentals=M * H, bytes_accessed=bytes_accessed)

    # VMEM budget = actual block footprint + headroom (never claim the full physical VMEM).
    footprint = (2 * bm * H * 2                 # activations row tile (double-buffered, bf16)
                 + 1 * H * H * 2                # w1 (single-buffered)
                 + 3 * H * 4                    # b1 / gamma / beta
                 + 2 * (bv * H * 2 + bv * 4)    # decoder weight + bias slices (double-buffered)
                 + 2 * bm * bv * out_isz        # output tile (double-buffered)
                 + bm * H * 2)                  # cached-transform scratch
    vmem_limit = min(int(footprint) + 32 * 1024 * 1024, 112 * 1024 * 1024)

    kernel = functools.partial(_lm_head_kernel, m_total=M, bm=bm)

    return pl.pallas_call(
        kernel,
        out_shape=jax.ShapeDtypeStruct((M, V), out_dtype),
        grid_spec=pltpu.PrefetchScalarGridSpec(
            num_scalar_prefetch=0,
            grid=(grid_m, grid_v),              # rows parallel (megacore), vocab arbitrary
            in_specs=[
                pl.BlockSpec((bm, H), lambda i, j: (i, 0)),   # activations row tile
                _const_spec((H, H)),                          # transform weight (resident)
                _const_spec((1, H)),                          # transform bias
                _const_spec((1, H)),                          # LayerNorm gamma
                _const_spec((1, H)),                          # LayerNorm beta
                pl.BlockSpec((bv, H), lambda i, j: (j, 0)),   # decoder weight slice ([V, H])
                pl.BlockSpec((1, bv), lambda i, j: (0, j)),   # decoder bias slice
            ],
            out_specs=pl.BlockSpec((bm, bv), lambda i, j: (i, j)),
            scratch_shapes=[pltpu.VMEM((bm, H), jnp.bfloat16)],   # cached transform output
        ),
        compiler_params=pltpu.CompilerParams(
            dimension_semantics=("parallel", "arbitrary"),
            vmem_limit_bytes=vmem_limit,
        ),
        cost_estimate=cost,
    )(x_bf, w1_bf, b1_r, g_r, be_r, wd_bf, bd_r)


def seq_rel_kernel(p_ref, w_ref, b_ref, o_ref):
    o_ref[...] = (jnp.dot(p_ref[...], w_ref[...], preferred_element_type=jnp.float32)
                  + b_ref[...]).astype(o_ref.dtype)


def seq_relationship(pooled, w2, b2):
    """pooled: [B, H]; w2: [2, H]; b2: [2]; returns [B, 2] f32.
    Tiny op; class dim padded to 128 lanes for an unmasked store, sliced back after the call."""
    B, H = pooled.shape
    n_cls = w2.shape[0]
    n_pad = 128
    w_pad = jnp.zeros((H, n_pad), jnp.float32).at[:, :n_cls].set(w2.T.astype(jnp.float32))
    b_pad = jnp.zeros((1, n_pad), jnp.float32).at[:, :n_cls].set(
        b2.reshape(1, n_cls).astype(jnp.float32))
    out = pl.pallas_call(
        seq_rel_kernel,
        out_shape=jax.ShapeDtypeStruct((B, n_pad), jnp.float32),
        in_specs=[pl.BlockSpec(memory_space=pltpu.MemorySpace.VMEM)] * 3,
        out_specs=pl.BlockSpec(memory_space=pltpu.MemorySpace.VMEM),
    )(pooled.astype(jnp.float32), w_pad, b_pad)
    return out[:, :n_cls]


def bert_pretraining_heads(sequence_output, pooled_output,
                           w1, b1, gamma, beta, emb_w, dec_bias, w2, b2,
                           *, tm=512, tv=1024, out_dtype=jnp.float32):
    B, S, H = sequence_output.shape
    V = emb_w.shape[0]
    x = sequence_output.reshape(B * S, H)
    scores = lm_prediction_head(x, w1, b1, gamma, beta, emb_w, dec_bias,
                                tm=tm, tv=tv, out_dtype=out_dtype)
    seq_rel = seq_relationship(pooled_output, w2, b2)
    return scores.reshape(B, S, V), seq_rel


def reference(sequence_output, pooled_output, w1, b1, gamma, beta, emb_w, dec_bias, w2, b2):
    bf = lambda a: a.astype(jnp.bfloat16).astype(jnp.float32)
    x = bf(sequence_output)
    y = jnp.matmul(x, bf(w1).T) + b1
    y = _gelu_tanh(y)
    mean = jnp.mean(y, axis=-1, keepdims=True)
    var = jnp.mean((y - mean) ** 2, axis=-1, keepdims=True)
    t = (y - mean) / jnp.sqrt(var + LN_EPS) * gamma + beta
    scores = jnp.matmul(bf(t), bf(emb_w).T) + dec_bias
    seq_rel = jnp.matmul(pooled_output, w2.T) + b2
    return scores, seq_rel


if __name__ == "__main__":
    # Small BERT-like config: batch=2, seq=8, hidden=32, vocab=512 (lane-dense).
    batch, seq = 2, 8
    hidden, vocab = 32, 512

    key = jax.random.PRNGKey(0)
    ks = jax.random.split(key, 8)

    sequence_output = jax.random.normal(ks[0], (batch, seq, hidden), dtype=jnp.float32)
    pooled_output = jax.random.normal(ks[1], (batch, hidden), dtype=jnp.float32)

    # Parameters in PyTorch layouts: Linear.weight = [out, in].
    w1 = jax.random.normal(ks[2], (hidden, hidden), dtype=jnp.float32) * 0.05
    b1 = jax.random.normal(ks[3], (hidden,), dtype=jnp.float32) * 0.02
    gamma = jnp.ones((hidden,), dtype=jnp.float32)
    beta = jnp.zeros((hidden,), dtype=jnp.float32)
    emb_w = jax.random.normal(ks[4], (vocab, hidden), dtype=jnp.float32) * 0.05  # tied embeddings
    dec_bias = jax.random.normal(ks[5], (vocab,), dtype=jnp.float32) * 0.02
    w2 = jax.random.normal(ks[6], (2, hidden), dtype=jnp.float32) * 0.05
    b2 = jax.random.normal(ks[7], (2,), dtype=jnp.float32) * 0.02

    # One-time weight preparation (outside the step): bf16 casts, torch-native layouts kept.
    w1_bf, emb_bf = prepare_lm_head_params(w1, emb_w)

    # tm=8 / tv=256 so the tiny test exercises multiple row tiles (parallel axis) and the
    # cached-transform scratch across multiple vocab tiles.  Production: tm=512-1024, tv=1024+.
    scores, seq_rel = bert_pretraining_heads(sequence_output, pooled_output,
                                             w1_bf, b1, gamma, beta, emb_bf, dec_bias, w2, b2,
                                             tm=8, tv=256)
    scores = jax.block_until_ready(scores)
    seq_rel = jax.block_until_ready(seq_rel)

    ref_scores, ref_rel = reference(sequence_output, pooled_output,
                                    w1, b1, gamma, beta, emb_w, dec_bias, w2, b2)

    assert scores.shape == (batch, seq, vocab)
    assert seq_rel.shape == (batch, 2)
    assert jnp.allclose(scores, ref_scores, atol=1e-2, rtol=1e-2), "prediction_scores mismatch"
    assert jnp.allclose(seq_rel, ref_rel, atol=1e-2, rtol=1e-2), "seq_relationship mismatch"

    print("KERNEL_OK")
</pallas_src>

<mosaic_0001>
module attributes {stable_mosaic.version = 11 : i64} {
  func.func @_lm_head_kernel(%arg0: i32, %arg1: i32, %arg2: memref<8x32xbf16, #tpu.memory_space<vmem>>, %arg3: memref<32x32xbf16, #tpu.memory_space<vmem>>, %arg4: memref<1x32xf32, #tpu.memory_space<vmem>>, %arg5: memref<1x32xf32, #tpu.memory_space<vmem>>, %arg6: memref<1x32xf32, #tpu.memory_space<vmem>>, %arg7: memref<256x32xbf16, #tpu.memory_space<vmem>>, %arg8: memref<1x256xf32, #tpu.memory_space<vmem>>, %arg9: memref<8x256xf32, #tpu.memory_space<vmem>>, %arg10: memref<8x32xbf16, #tpu.memory_space<vmem>>) attributes {dimension_semantics = [#tpu.dimension_semantics<parallel>, #tpu.dimension_semantics<arbitrary>], iteration_bounds = array<i64: 2, 2>, scalar_prefetch = 0 : i64, scratch_operands = 1 : i64, tpu.core_type = #tpu.core_type<tc>, window_params = [{transform_indices = @transform_0, window_bounds = array<i64: 8, 32>}, {pipeline_mode = #tpu.pipeline_mode<synchronous>, transform_indices = @transform_1, window_bounds = array<i64: 32, 32>}, {pipeline_mode = #tpu.pipeline_mode<synchronous>, transform_indices = @transform_2, window_bounds = array<i64: 1, 32>}, {pipeline_mode = #tpu.pipeline_mode<synchronous>, transform_indices = @transform_3, window_bounds = array<i64: 1, 32>}, {pipeline_mode = #tpu.pipeline_mode<synchronous>, transform_indices = @transform_4, window_bounds = array<i64: 1, 32>}, {transform_indices = @transform_5, window_bounds = array<i64: 256, 32>}, {transform_indices = @transform_6, window_bounds = array<i64: 1, 256>}, {transform_indices = @transform_7, window_bounds = array<i64: 8, 256>}]} {
    %c0_i32 = arith.constant 0 : i32
    %0 = arith.cmpi eq, %arg1, %c0_i32 : i32
    %1 = arith.extui %0 : i1 to i32
    %c0_i32_0 = arith.constant 0 : i32
    %2 = arith.cmpi ne, %1, %c0_i32_0 : i32
    scf.if %2 {
      %c0_8 = arith.constant 0 : index
      %c0_9 = arith.constant 0 : index
      %10 = vector.load %arg2[%c0_8, %c0_9] : memref<8x32xbf16, #tpu.memory_space<vmem>>, vector<8x32xbf16>
      %c0_10 = arith.constant 0 : index
      %c0_11 = arith.constant 0 : index
      %11 = vector.load %arg3[%c0_10, %c0_11] : memref<32x32xbf16, #tpu.memory_space<vmem>>, vector<32x32xbf16>
      %cst_12 = arith.constant dense<0.000000e+00> : vector<8x32xf32>
      %12 = tpu.matmul %10, %11, %cst_12 {dimension_numbers = #tpu.dot_dimension_numbers<[1], [1], [0], [0], [0, 0, 1, 0], [], []>} : vector<8x32xbf16>, vector<32x32xbf16>, vector<8x32xf32> -> vector<8x32xf32>
      %c0_13 = arith.constant 0 : index
      %c0_14 = arith.constant 0 : index
      %13 = vector.load %arg4[%c0_13, %c0_14] : memref<1x32xf32, #tpu.memory_space<vmem>>, vector<1x32xf32>
      %14 = vector.broadcast %13 : vector<1x32xf32> to vector<8x32xf32>
      %15 = arith.addf %12, %14 : vector<8x32xf32>
      %cst_15 = arith.constant 5.000000e-01 : f32
      %16 = vector.broadcast %cst_15 : f32 to vector<8x32xf32>
      %17 = arith.mulf %16, %15 : vector<8x32xf32>
      %cst_16 = arith.constant 4.471500e-02 : f32
      %18 = vector.broadcast %cst_16 : f32 to vector<8x32xf32>
      %19 = arith.mulf %18, %15 : vector<8x32xf32>
      %20 = arith.mulf %19, %15 : vector<8x32xf32>
      %21 = arith.mulf %20, %15 : vector<8x32xf32>
      %22 = arith.addf %15, %21 : vector<8x32xf32>
      %cst_17 = arith.constant 0.797884583 : f32
      %23 = vector.broadcast %cst_17 : f32 to vector<8x32xf32>
      %24 = arith.mulf %23, %22 : vector<8x32xf32>
      %25 = math.tanh %24 : vector<8x32xf32>
      %cst_18 = arith.constant 1.000000e+00 : f32
      %26 = vector.broadcast %cst_18 : f32 to vector<8x32xf32>
      %27 = arith.addf %26, %25 : vector<8x32xf32>
      %28 = arith.mulf %17, %27 : vector<8x32xf32>
      %cst_19 = arith.constant dense<0.000000e+00> : vector<8xf32>
      %29 = vector.multi_reduction <add>, %28, %cst_19 [1] : vector<8x32xf32> to vector<8xf32>
      %30 = vector.shape_cast %29 : vector<8xf32> to vector<8x1xf32>
      %cst_20 = arith.constant 3.200000e+01 : f32
      %31 = vector.broadcast %cst_20 : f32 to vector<8x1xf32>
      %32 = arith.divf %30, %31 : vector<8x1xf32>
      %33 = vector.broadcast %32 : vector<8x1xf32> to vector<8x32xf32>
      %34 = arith.subf %28, %33 : vector<8x32xf32>
      %35 = arith.mulf %34, %34 : vector<8x32xf32>
      %cst_21 = arith.constant dense<0.000000e+00> : vector<8xf32>
      %36 = vector.multi_reduction <add>, %35, %cst_21 [1] : vector<8x32xf32> to vector<8xf32>
      %37 = vector.shape_cast %36 : vector<8xf32> to vector<8x1xf32>
      %cst_22 = arith.constant 3.200000e+01 : f32
      %38 = vector.broadcast %cst_22 : f32 to vector<8x1xf32>
      %39 = arith.divf %37, %38 : vector<8x1xf32>
      %cst_23 = arith.constant 9.99999996E-13 : f32
      %40 = vector.broadcast %cst_23 : f32 to vector<8x1xf32>
      %41 = arith.addf %39, %40 : vector<8x1xf32>
      %42 = math.rsqrt %41 : vector<8x1xf32>
      %43 = vector.broadcast %42 : vector<8x1xf32> to vector<8x32xf32>
      %44 = arith.mulf %34, %43 : vector<8x32xf32>
      %c0_24 = arith.constant 0 : index
      %c0_25 = arith.constant 0 : index
      %45 = vector.load %arg5[%c0_24, %c0_25] : memref<1x32xf32, #tpu.memory_space<vmem>>, vector<1x32xf32>
      %46 = vector.broadcast %45 : vector<1x32xf32> to vector<8x32xf32>
      %47 = arith.mulf %44, %46 : vector<8x32xf32>
      %c0_26 = arith.constant 0 : index
      %c0_27 = arith.constant 0 : index
      %48 = vector.load %arg6[%c0_26, %c0_27] : memref<1x32xf32, #tpu.memory_space<vmem>>, vector<1x32xf32>
      %49 = vector.broadcast %48 : vector<1x32xf32> to vector<8x32xf32>
      %50 = arith.addf %47, %49 : vector<8x32xf32>
      %51 = arith.truncf %50 : vector<8x32xf32> to vector<8x32xbf16>
      %c0_28 = arith.constant 0 : index
      %c0_29 = arith.constant 0 : index
      %52 = vector.load %arg10[%c0_28, %c0_29] : memref<8x32xbf16, #tpu.memory_space<vmem>>, vector<8x32xbf16>
      tpu.vector_store %arg10[%c0_28, %c0_29], %51 {strides = array<i32>} : memref<8x32xbf16, #tpu.memory_space<vmem>>, vector<8x32xbf16>,
    } else {
    }
    %c0 = arith.constant 0 : index
    %c0_1 = arith.constant 0 : index
    %3 = vector.load %arg10[%c0, %c0_1] : memref<8x32xbf16, #tpu.memory_space<vmem>>, vector<8x32xbf16>
    %c0_2 = arith.constant 0 : index
    %c0_3 = arith.constant 0 : index
    %4 = vector.load %arg7[%c0_2, %c0_3] : memref<256x32xbf16, #tpu.memory_space<vmem>>, vector<256x32xbf16>
    %cst = arith.constant dense<0.000000e+00> : vector<8x256xf32>
    %5 = tpu.matmul %3, %4, %cst {dimension_numbers = #tpu.dot_dimension_numbers<[1], [1], [0], [0], [0, 0, 1, 0], [], []>} : vector<8x32xbf16>, vector<256x32xbf16>, vector<8x256xf32> -> vector<8x256xf32>
    %c0_4 = arith.constant 0 : index
    %c0_5 = arith.constant 0 : index
    %6 = vector.load %arg8[%c0_4, %c0_5] : memref<1x256xf32, #tpu.memory_space<vmem>>, vector<1x256xf32>
    %7 = vector.broadcast %6 : vector<1x256xf32> to vector<8x256xf32>
    %8 = arith.addf %5, %7 : vector<8x256xf32>
    %c0_6 = arith.constant 0 : index
    %c0_7 = arith.constant 0 : index
    %9 = vector.load %arg9[%c0_6, %c0_7] : memref<8x256xf32, #tpu.memory_space<vmem>>, vector<8x256xf32>
    tpu.vector_store %arg9[%c0_6, %c0_7], %8 {strides = array<i32>} : memref<8x256xf32, #tpu.memory_space<vmem>>, vector<8x256xf32>,
    return
  }
  func.func @transform_0(%arg0: i32, %arg1: i32) -> (i32, i32) {
    %c0_i32 = arith.constant 0 : i32
    %c0_i32_0 = arith.constant 0 : i32
    return %arg0, %c0_i32 : i32, i32
  }
  func.func @transform_1(%arg0: i32, %arg1: i32) -> (i32, i32) {
    %c0_i32 = arith.constant 0 : i32
    %c0_i32_0 = arith.constant 0 : i32
    %c0_i32_1 = arith.constant 0 : i32
    return %c0_i32, %c0_i32_0 : i32, i32
  }
  func.func @transform_2(%arg0: i32, %arg1: i32) -> (i32, i32) {
    %c0_i32 = arith.constant 0 : i32
    %c0_i32_0 = arith.constant 0 : i32
    %c0_i32_1 = arith.constant 0 : i32
    return %c0_i32, %c0_i32_0 : i32, i32
  }
  func.func @transform_3(%arg0: i32, %arg1: i32) -> (i32, i32) {
    %c0_i32 = arith.constant 0 : i32
    %c0_i32_0 = arith.constant 0 : i32
    %c0_i32_1 = arith.constant 0 : i32
    return %c0_i32, %c0_i32_0 : i32, i32
  }
  func.func @transform_4(%arg0: i32, %arg1: i32) -> (i32, i32) {
    %c0_i32 = arith.constant 0 : i32
    %c0_i32_0 = arith.constant 0 : i32
    %c0_i32_1 = arith.constant 0 : i32
    return %c0_i32, %c0_i32_0 : i32, i32
  }
  func.func @transform_5(%arg0: i32, %arg1: i32) -> (i32, i32) {
    %c0_i32 = arith.constant 0 : i32
    %c0_i32_0 = arith.constant 0 : i32
    return %arg1, %c0_i32 : i32, i32
  }
  func.func @transform_6(%arg0: i32, %arg1: i32) -> (i32, i32) {
    %c0_i32 = arith.constant 0 : i32
    %c0_i32_0 = arith.constant 0 : i32
    return %c0_i32, %arg1 : i32, i32
  }
  func.func @transform_7(%arg0: i32, %arg1: i32) -> (i32, i32) {
    %c0_i32 = arith.constant 0 : i32
    return %arg0, %arg1 : i32, i32
  }
}

</mosaic_0001>

<llo_original>
// kernel: tpu_custom_call.1
$region0: #{tpu_custom_call.1}
  #allocation0 [shape = 'u32[]', space=smem, size = 0x4, offset = 0x4, fixed_abs, tag = 'smem constant byte address 0x4 - core index']
  #allocation1 [shape = 'u32[144,128]{1,0:T(1,128)}', space=vmem, size = 0x12000, scoped, tag = 'internal scratch']
  #allocation2 [shape = 'bf16[8,32]{1,0:T(8,128)(2,1)}', space=vmem, size = 0x800, scoped, tag = 'scratch operand']
  %s0 = inlined_call_operand.vmem [shape: bf16[16,32], index: 0, kind: input, shape index: {}]
  %s1 = inlined_call_operand.vmem [shape: bf16[32,32], index: 1, kind: input, shape index: {}]
  %s2 = inlined_call_operand.vmem [shape: f32[1,32], index: 2, kind: input, shape index: {}]
  %s3 = inlined_call_operand.vmem [shape: f32[1,32], index: 3, kind: input, shape index: {}]
  %s4 = inlined_call_operand.vmem [shape: f32[1,32], index: 4, kind: input, shape index: {}]
  %s5 = inlined_call_operand.vmem [shape: bf16[512,32], index: 5, kind: input, shape index: {}]
  %s6 = inlined_call_operand.vmem [shape: f32[1,512], index: 6, kind: input, shape index: {}]
  %s7 = inlined_call_operand.hbm [shape: f32[16,512], index: 7, kind: output, shape index: {}]
  %s8 = sld [smem:[#allocation0]]
  $region65: #{tpu_custom_call.1} parent=0
    _
  %s10 = ssub.s32 1, %s8
  %s11 = scalar_select 0, %s10, %s8
  $region1: #{tpu_custom_call.1} parent=0
    #allocation3 [shape = 'u8[16384]{0}', space=vmem, size = 0x4000, scoped, tag = 'output window, operand 0']
    #allocation4 [shape = 's32[2]{0}', space=sflag, size = 0x8, scoped, tag = 'scoped memory for tpu_custom_call.1']
    %12 = vsyncpa [#allocation4], 0
    %s13 = scalar_lea.sflag [#allocation4], 1
    %14 = vsyncpa %s13, 0
    loop: start=0, step=1, limit=6
    $region2: #{tpu_custom_call.1} parent=1 // loop_pre_header
      _
    $region3: #{tpu_custom_call.1} parent=1 // loop_header
      %s16 = sphi 0, %s20
      %p17 = scmp.ge.s32.totalorder %s16, 6
      %s23 = sphi 0, %s35
      %s24 = sphi 0, %s31
      %s25 = sphi 0, %s23
      %s26 = sphi 0, %s24
      %s27 = sphi 0, %s25
      %s28 = sphi 0, %s26
      %s38 = sphi 0, %s40
      %s41 = sphi 0, %s38
      %s42 = sphi 0, %s41
      %s58 = sphi 0, %s42
      %s62 = sphi 0, %s62
      %s64 = sphi 0, %s62
      %s65 = sphi 0, %s64
      %s79 = sphi 0, %s65
      %s83 = sphi 0, %s83
      %s85 = sphi 0, %s83
      %s86 = sphi 0, %s85
      %s100 = sphi 0, %s86
      %s104 = sphi 0, %s104
      %s106 = sphi 0, %s104
      %s107 = sphi 0, %s106
      %s121 = sphi 0, %s107
      %s125 = sphi 0, %s125
      %s127 = sphi 0, %s125
      %s128 = sphi 0, %s127
      %s142 = sphi 0, %s128
      %s148 = sphi 0, %s150
      %s151 = sphi 0, %s148
      %s152 = sphi 0, %s151
      %s168 = sphi 0, %s152
      %s174 = sphi 0, %s176
      %s177 = sphi 0, %s174
      %s178 = sphi 0, %s177
      %s194 = sphi 0, %s178
      %s202 = sphi 0, %s204
      %s205 = sphi 0, %s202
      %s206 = sphi 0, %s205
      %s222 = sphi 0, %s206
    $region4: #{tpu_custom_call.1} parent=1 // loop_header_branch
      %19 = sbr.rel (%p17) target = $region8
    $region5: #{tpu_custom_call.1} parent=1 // loop_body
      %s21 = ssub.s32 %s16, 1
      %s22 = ssub.s32 %s16, 2
      %s29 = sadd.s32 1, %s24
      %p30 = scmp.ge.s32.totalorder %s29, 2
      %s31 = scalar_select %p30, 0, %s29
      %s32 = sadd.s32 1, %s23
      %s33 = scalar_select %p30, %s32, %s23
      %p34 = scmp.ge.s32.totalorder %s33, 2
      %s35 = scalar_select %p34, 0, %s33
      %s36 = ssub.s32 %s23, %s35
      %p37 = scmp.eq.s32.totalorder %s36, 0
      %s39 = sadd.s32 %s38, 1
      %s40 = scalar_select %p37, %s38, %s39
      %p43 = pneg %p37
      %p44 = scmp.eq.s32.totalorder %s16, 3
      %p45 = por %p43, %p44
      %p46 = scmp.ne.s32.totalorder %s38, %s41
      %p47 = scmp.eq.s32.totalorder %s16, 0
      %p48 = por %p46, %p47
      %p49 = scmp.ne.s32.totalorder %s38, %s41
      %p50 = scmp.eq.s32.totalorder %s21, 3
      %p51 = por %p49, %p50
      %p52 = scmp.ne.s32.totalorder %s41, %s42
      %p53 = scmp.eq.s32.totalorder %s21, 0
      %p54 = por %p52, %p53
      %p55 = scmp.ne.s32.totalorder %s41, %s42
      %p56 = scmp.eq.s32.totalorder %s22, 3
      %p57 = por %p55, %p56
      %p59 = scmp.ne.s32.totalorder %s42, %s58
      %p60 = scmp.eq.s32.totalorder %s22, 0
      %p61 = por %p59, %p60
      %s63 = sadd.s32 %s62, 1
      %p66 = scmp.eq.s32.totalorder %s16, 3
      %p67 = scmp.ne.s32.totalorder %s62, %s64
      %p68 = scmp.eq.s32.totalorder %s16, 0
      %p69 = por %p67, %p68
      %p70 = scmp.ne.s32.totalorder %s62, %s64
      %p71 = scmp.eq.s32.totalorder %s21, 3
      %p72 = por %p70, %p71
      %p73 = scmp.ne.s32.totalorder %s64, %s65
      %p74 = scmp.eq.s32.totalorder %s21, 0
      %p75 = por %p73, %p74
      %p76 = scmp.ne.s32.totalorder %s64, %s65
      %p77 = scmp.eq.s32.totalorder %s22, 3
      %p78 = por %p76, %p77
      %p80 = scmp.ne.s32.totalorder %s65, %s79
      %p81 = scmp.eq.s32.totalorder %s22, 0
      %p82 = por %p80, %p81
      %s84 = sadd.s32 %s83, 1
      %p87 = scmp.eq.s32.totalorder %s16, 3
      %p88 = scmp.ne.s32.totalorder %s83, %s85
      %p89 = scmp.eq.s32.totalorder %s16, 0
      %p90 = por %p88, %p89
      %p91 = scmp.ne.s32.totalorder %s83, %s85
      %p92 = scmp.eq.s32.totalorder %s21, 3
      %p93 = por %p91, %p92
      %p94 = scmp.ne.s32.totalorder %s85, %s86
      %p95 = scmp.eq.s32.totalorder %s21, 0
      %p96 = por %p94, %p95
      %p97 = scmp.ne.s32.totalorder %s85, %s86
      %p98 = scmp.eq.s32.totalorder %s22, 3
      %p99 = por %p97, %p98
      %p101 = scmp.ne.s32.totalorder %s86, %s100
      %p102 = scmp.eq.s32.totalorder %s22, 0
      %p103 = por %p101, %p102
      %s105 = sadd.s32 %s104, 1
      %p108 = scmp.eq.s32.totalorder %s16, 3
      %p109 = scmp.ne.s32.totalorder %s104, %s106
      %p110 = scmp.eq.s32.totalorder %s16, 0
      %p111 = por %p109, %p110
      %p112 = scmp.ne.s32.totalorder %s104, %s106
      %p113 = scmp.eq.s32.totalorder %s21, 3
      %p114 = por %p112, %p113
      %p115 = scmp.ne.s32.totalorder %s106, %s107
      %p116 = scmp.eq.s32.totalorder %s21, 0
      %p117 = por %p115, %p116
      %p118 = scmp.ne.s32.totalorder %s106, %s107
      %p119 = scmp.eq.s32.totalorder %s22, 3
      %p120 = por %p118, %p119
      %p122 = scmp.ne.s32.totalorder %s107, %s121
      %p123 = scmp.eq.s32.totalorder %s22, 0
      %p124 = por %p122, %p123
      %s126 = sadd.s32 %s125, 1
      %p129 = scmp.eq.s32.totalorder %s16, 3
      %p130 = scmp.ne.s32.totalorder %s125, %s127
      %p131 = scmp.eq.s32.totalorder %s16, 0
      %p132 = por %p130, %p131
      %p133 = scmp.ne.s32.totalorder %s125, %s127
      %p134 = scmp.eq.s32.totalorder %s21, 3
      %p135 = por %p133, %p134
      %p136 = scmp.ne.s32.totalorder %s127, %s128
      %p137 = scmp.eq.s32.totalorder %s21, 0
      %p138 = por %p136, %p137
      %p139 = scmp.ne.s32.totalorder %s127, %s128
      %p140 = scmp.eq.s32.totalorder %s22, 3
      %p141 = por %p139, %p140
      %p143 = scmp.ne.s32.totalorder %s128, %s142
      %p144 = scmp.eq.s32.totalorder %s22, 0
      %p145 = por %p143, %p144
      %s146 = ssub.s32 %s24, %s31
      %p147 = scmp.eq.s32.totalorder %s146, 0
      %s149 = sadd.s32 %s148, 1
      %s150 = scalar_select %p147, %s148, %s149
      %p153 = pneg %p147
      %p154 = scmp.eq.s32.totalorder %s16, 3
      %p155 = por %p153, %p154
      %p156 = scmp.ne.s32.totalorder %s148, %s151
      %p157 = scmp.eq.s32.totalorder %s16, 0
      %p158 = por %p156, %p157
      %p159 = scmp.ne.s32.totalorder %s148, %s151
      %p160 = scmp.eq.s32.totalorder %s21, 3
      %p161 = por %p159, %p160
      %p162 = scmp.ne.s32.totalorder %s151, %s152
      %p163 = scmp.eq.s32.totalorder %s21, 0
      %p164 = por %p162, %p163
      %p165 = scmp.ne.s32.totalorder %s151, %s152
      %p166 = scmp.eq.s32.totalorder %s22, 3
      %p167 = por %p165, %p166
      %p169 = scmp.ne.s32.totalorder %s152, %s168
      %p170 = scmp.eq.s32.totalorder %s22, 0
      %p171 = por %p169, %p170
      %s172 = ssub.s32 %s24, %s31
      %p173 = scmp.eq.s32.totalorder %s172, 0
      %s175 = sadd.s32 %s174, 1
      %s176 = scalar_select %p173, %s174, %s175
      %p179 = pneg %p173
      %p180 = scmp.eq.s32.totalorder %s16, 3
      %p181 = por %p179, %p180
      %p182 = scmp.ne.s32.totalorder %s174, %s177
      %p183 = scmp.eq.s32.totalorder %s16, 0
      %p184 = por %p182, %p183
      %p185 = scmp.ne.s32.totalorder %s174, %s177
      %p186 = scmp.eq.s32.totalorder %s21, 3
      %p187 = por %p185, %p186
      %p188 = scmp.ne.s32.totalorder %s177, %s178
      %p189 = scmp.eq.s32.totalorder %s21, 0
      %p190 = por %p188, %p189
      %p191 = scmp.ne.s32.totalorder %s177, %s178
      %p192 = scmp.eq.s32.totalorder %s22, 3
      %p193 = por %p191, %p192
      %p195 = scmp.ne.s32.totalorder %s178, %s194
      %p196 = scmp.eq.s32.totalorder %s22, 0
      %p197 = por %p195, %p196
      %s198 = ssub.s32 %s23, %s35
      %s199 = ssub.s32 %s24, %s31
      %s200 = sor.u32 %s198, %s199
      %p201 = scmp.eq.s32.totalorder %s200, 0
      %s203 = sadd.s32 %s202, 1
      %s204 = scalar_select %p201, %s202, %s203
      %p207 = pneg %p201
      %p208 = scmp.eq.s32.totalorder %s16, 3
      %p209 = por %p207, %p208
      %p210 = scmp.ne.s32.totalorder %s202, %s205
      %p211 = scmp.eq.s32.totalorder %s16, 0
      %p212 = por %p210, %p211
      %p213 = scmp.ne.s32.totalorder %s202, %s205
      %p214 = scmp.eq.s32.totalorder %s21, 3
      %p215 = por %p213, %p214
      %p216 = scmp.ne.s32.totalorder %s205, %s206
      %p217 = scmp.eq.s32.totalorder %s21, 0
      %p218 = por %p216, %p217
      %p219 = scmp.ne.s32.totalorder %s205, %s206
      %p220 = scmp.eq.s32.totalorder %s22, 3
      %p221 = por %p219, %p220
      %p223 = scmp.ne.s32.totalorder %s206, %s222
      %p224 = scmp.eq.s32.totalorder %s22, 0
      %p225 = por %p223, %p224
      %p226 = scmp.le.s32.totalorder 1, %s16
      %p227 = scmp.lt.s32.totalorder %s16, 5
      %p228 = pnand %p226, %p227
      %p229 = pneg %p228
      // Predicated region
      $region9: #{tpu_custom_call.1} parent=5 // pred_check
        _
      $region10: #{tpu_custom_call.1} parent=5 // pred_check_branch
        %231 = sbr.rel (%p228) target = $region12
      $region11: #{tpu_custom_call.1} parent=5 // pred_region
        %s232 = ssub.s32 %s16, 1
        // Predicated region
        $region13: #{tpu_custom_call.1} parent=11 // pred_check
          %p233 = pneg %p75
        $region14: #{tpu_custom_call.1} parent=11 // pred_check_branch
          %235 = sbr.rel (%p233) target = $region16
        $region15: #{tpu_custom_call.1} parent=11 // pred_region
          _
        $region16: #{tpu_custom_call.1} parent=11 // pred_fallthru
          _
        // Predicated region
        $region17: #{tpu_custom_call.1} parent=11 // pred_check
          %p236 = pneg %p96
        $region18: #{tpu_custom_call.1} parent=11 // pred_check_branch
          %238 = sbr.rel (%p236) target = $region20
        $region19: #{tpu_custom_call.1} parent=11 // pred_region
          _
        $region20: #{tpu_custom_call.1} parent=11 // pred_fallthru
          _
        // Predicated region
        $region21: #{tpu_custom_call.1} parent=11 // pred_check
          %p239 = pneg %p117
        $region22: #{tpu_custom_call.1} parent=11 // pred_check_branch
          %241 = sbr.rel (%p239) target = $region24
        $region23: #{tpu_custom_call.1} parent=11 // pred_region
          _
        $region24: #{tpu_custom_call.1} parent=11 // pred_fallthru
          _
        // Predicated region
        $region25: #{tpu_custom_call.1} parent=11 // pred_check
          %p242 = pneg %p138
        $region26: #{tpu_custom_call.1} parent=11 // pred_check_branch
          %244 = sbr.rel (%p242) target = $region28
        $region27: #{tpu_custom_call.1} parent=11 // pred_region
          _
        $region28: #{tpu_custom_call.1} parent=11 // pred_fallthru
          _
      $region12: #{tpu_custom_call.1} parent=5 // pred_fallthru
        _
      %p245 = scmp.lt.s32.totalorder %s16, 4
      // Predicated region
      $region29: #{tpu_custom_call.1} parent=5 // pred_check
        %p246 = pneg %p245
      $region30: #{tpu_custom_call.1} parent=5 // pred_check_branch
        %248 = sbr.rel (%p246) target = $region32
      $region31: #{tpu_custom_call.1} parent=5 // pred_region
        // Predicated region
        $region33: #{tpu_custom_call.1} parent=31 // pred_check
          %p249 = pneg %p48
        $region34: #{tpu_custom_call.1} parent=31 // pred_check_branch
          %251 = sbr.rel (%p249) target = $region36
        $region35: #{tpu_custom_call.1} parent=31 // pred_region
          %p252 = scmp.lt.s32.totalorder %s23, 1
          %s253 = scalar_select %p252, %s23, 1
          %s254 = smul.addr %s253, 4
          %s255 = scalar_lea.vmem %s0, %s254
        $region36: #{tpu_custom_call.1} parent=31 // pred_fallthru
          _
        // Predicated region
        $region37: #{tpu_custom_call.1} parent=31 // pred_check
          %p256 = pneg %p158
        $region38: #{tpu_custom_call.1} parent=31 // pred_check_branch
          %258 = sbr.rel (%p256) target = $region40
        $region39: #{tpu_custom_call.1} parent=31 // pred_region
          %s259 = smul.u32 32, %s24
          %p260 = scmp.lt.s32.totalorder %s259, 63
          %s261 = scalar_select %p260, %s259, 63
          %s262 = smul.addr %s261, 4
          %s263 = scalar_lea.vmem %s5, %s262
          %s264 = smul.u32 32, %s24
        $region40: #{tpu_custom_call.1} parent=31 // pred_fallthru
          _
        // Predicated region
        $region41: #{tpu_custom_call.1} parent=31 // pred_check
          %p265 = pneg %p184
        $region42: #{tpu_custom_call.1} parent=31 // pred_check_branch
          %267 = sbr.rel (%p265) target = $region44
        $region43: #{tpu_custom_call.1} parent=31 // pred_region
          %s268 = smul.u32 2, %s24
          %p269 = scmp.lt.s32.totalorder %s268, 3
          %s270 = scalar_select %p269, %s268, 3
          %s271 = scalar_lea.vmem %s6, %s270
          %s272 = smul.u32 2, %s24
        $region44: #{tpu_custom_call.1} parent=31 // pred_fallthru
          _
      $region32: #{tpu_custom_call.1} parent=5 // pred_fallthru
        _
      %p273 = scmp.le.s32.totalorder 1, %s16
      %p274 = scmp.lt.s32.totalorder %s16, 5
      %p275 = pnand %p273, %p274
      %p276 = pneg %p275
      // Predicated region
      $region45: #{tpu_custom_call.1} parent=5 // pred_check
        _
      $region46: #{tpu_custom_call.1} parent=5 // pred_check_branch
        %278 = sbr.rel (%p275) target = $region48
      $region47: #{tpu_custom_call.1} parent=5 // pred_region
        %s279 = ssub.s32 %s16, 1
        %p280 = scmp.lt.s32.totalorder %s25, 1
        %s281 = scalar_select %p280, %s25, 1
        %s282 = smul.addr %s281, 4
        %s283 = scalar_lea.vmem %s0, %s282
        %p284 = pneg %p54
        %p285 = pneg %p51
        %p286 = pneg %p75
        %p287 = pneg %p72
        %p288 = pneg %p96
        %p289 = pneg %p93
        %p290 = pneg %p117
        %p291 = pneg %p114
        %p292 = pneg %p138
        %p293 = pneg %p135
        %s294 = smul.u32 32, %s26
        %p295 = scmp.lt.s32.totalorder %s294, 63
        %s296 = scalar_select %p295, %s294, 63
        %s297 = smul.addr %s296, 4
        %s298 = scalar_lea.vmem %s5, %s297
        %p299 = pneg %p164
        %p300 = pneg %p161
        %s301 = smul.u32 2, %s26
        %p302 = scmp.lt.s32.totalorder %s301, 3
        %s303 = scalar_select %p302, %s301, 3
        %s304 = scalar_lea.vmem %s6, %s303
        %p305 = pneg %p190
        %p306 = pneg %p187
        %p307 = pneg %p218
        %p308 = pneg %p215
        %s309 = sand.u32 %s205, 1
        %s310 = scalar_lea.sflag [#allocation4], %s309
        %s311 = sand.u32 %s205, 1
        %s312 = smul.addr %s311, 16
        %s313 = scalar_lea.vmem [#allocation3], %s312
        %p314 = scmp.lt.s32.totalorder %s25, 1
        %s315 = scalar_select %p314, %s25, 1
        %s316 = smul.addr %s315, 4
        %s317 = scalar_lea.vmem %s0, %s316
        %s318 = smul.u32 32, %s26
        %p319 = scmp.lt.s32.totalorder %s318, 63
        %s320 = scalar_select %p319, %s318, 63
        %s321 = smul.addr %s320, 4
        %s322 = scalar_lea.vmem %s5, %s321
        %s323 = smul.u32 32, %s26
        %s324 = smul.u32 2, %s26
        %p325 = scmp.lt.s32.totalorder %s324, 3
        %s326 = scalar_select %p325, %s324, 3
        %s327 = scalar_lea.vmem %s6, %s326
        %s328 = smul.u32 2, %s26
        %s329 = smul.u32 2, %s26
        %p331 = scmp.eq.s32.totalorder %s26, 0
        // Predicated region
        $region49: #{tpu_custom_call.1} parent=47 // pred_check
          %p332 = pneg %p331
        $region50: #{tpu_custom_call.1} parent=47 // pred_check_branch
          %334 = sbr.rel (%p332) target = $region52
        $region51: #{tpu_custom_call.1} parent=47 // pred_region
          %v335 = vld [vmem:[%s317] sm:$0xf]
          %v336 = vld [vmem:[%s1] sm:$0xf]
          %v337 = vld [vmem:[%s1 + $0x4] sm:$0xf]
          %v338 = vld [vmem:[%s1 + $0x8] sm:$0xf]
          %v339 = vld [vmem:[%s1 + $0xc] sm:$0xf]
          %v340 = vld [vmem:[%s2] sm:$0x1]
          %v342 = vlaneseq
          %v343 = vshrl.u32 %v342, 7
          %v344 = vsub.s32 0, %v343
          %v345 = vrot.slane %v340, %v344
          %v351 = vunpack.c.l.b16 %v336
          %v352 = vunpack.c.l.b16 %v337
          %v353 = vunpack.c.l.b16 %v338
          %v354 = vunpack.c.l.b16 %v339
          %v355 = vpack.c.b16 %v352, %v351
          %v356 = vpack.c.b16 %v354, %v353
          %vm357 = vcmask 261120
          %v359 = vsel %vm357, %v335, 0
          %v362 = vsel %vm357, %v355, 0
          %v365 = vsel %vm357, %v356, 0
          %367 = vmatprep.subr.bf16.mxu0 0
          %368 = vmatpush1.bf16.xpose.msra.mxu0 %v362
          %369 = vmatprep.subr.bf16.mxu0 0
          %370 = vmatpush1.bf16.xpose.msra.mxu0 %v365
          %371 = vmatprep.subr.bf16.mxu0 0
          %372 = vmatpush1.bf16.xpose.msra.mxu0 0
          %373 = vmatprep.subr.bf16.mxu0 0
          %374 = vmatpush1.bf16.xpose.msra.mxu0 0
          %375 = vmatprep.subr.bf16.mxu0 0
          %376 = vmatpush1.bf16.xpose.msra.mxu0 0
          %377 = vmatprep.subr.bf16.mxu0 0
          %378 = vmatpush1.bf16.xpose.msra.mxu0 0
          %379 = vmatprep.subr.bf16.mxu0 0
          %380 = vmatpush1.bf16.xpose.msra.mxu0 0
          %381 = vmatprep.subr.bf16.mxu0 0
          %382 = vmatpush1.bf16.xpose.msra.mxu0 0
          %383 = vmatprep.subr.bf16.mxu0 0
          %384 = vmatpush1.bf16.xpose.msra.mxu0 0
          %385 = vmatprep.subr.bf16.mxu0 0
          %386 = vmatpush1.bf16.xpose.msra.mxu0 0
          %387 = vmatprep.subr.bf16.mxu0 0
          %388 = vmatpush1.bf16.xpose.msra.mxu0 0
          %389 = vmatprep.subr.bf16.mxu0 0
          %390 = vmatpush1.bf16.xpose.msra.mxu0 0
          %391 = vmatprep.subr.bf16.mxu0 0
          %392 = vmatpush1.bf16.xpose.msra.mxu0 0
          %393 = vmatprep.subr.bf16.mxu0 0
          %394 = vmatpush1.bf16.xpose.msra.mxu0 0
          %395 = vmatprep.subr.bf16.mxu0 0
          %396 = vmatpush1.bf16.xpose.msra.mxu0 0
          %397 = vmatprep.subr.bf16.mxu0 0
          %398 = vmatpush1.bf16.xpose.msra.mxu0 0
          %399 = vmatprep.mubr.bf16.mxu0 0
          %400 = vmatmul.mubr.bf16.gmra.mrb[0].mxu0 %v359
          %v401 = vpop.f32.mrb[0].mxu0
          %v402 = vadd.f32 %v345, %v401
          %v403 = vpop.f32.mrb[0].mxu0
          %v404 = vpop.f32.mrb[0].mxu0
          %v405 = vpop.f32.mrb[0].mxu0
          %406 = vdwg.mxu0
          %v407 = vmul.f32 %v402, 0.5
          %v408 = vmul.f32 %v402, 0.044715
          %v409 = vmul.f32 %v408, %v402
          %v410 = vmul.f32 %v409, %v402
          %v411 = vadd.f32 %v402, %v410
          %v412 = vmul.f32 %v411, 0.7978846
          %v413 = vtanh.pop %v412
          %v414 = vadd.f32 %v413, 1.0
          %v415 = vmul.f32 %v407, %v414
          %v416 = vsel %vm357, %v415, 0.0
          %417 = vadd.xlane.f32.xlu0 %v416
          %v418 = vpop.xlane.xlu0 %417
          %v419 = vrcp.pop 32.0
          %v420 = vmul.f32 %v418, %v419
          %v421 = vsub.f32 %v415, %v420
          %v422 = vmul.f32 %v421, %v421
          %v423 = vsel %vm357, %v422, 0.0
          %424 = vadd.xlane.f32.xlu0 %v423
          %v425 = vpop.xlane.xlu0 %424
          %v426 = vmul.f32 %v425, %v419
          %v427 = vadd.f32 %v426, 1e-12
          %v428 = vrsqrt.pop %v427
          %v429 = vmul.f32 %v421, %v428
          %v430 = vld [vmem:[%s3] sm:$0x1]
          %v432 = vlaneseq
          %v433 = vshrl.u32 %v432, 7
          %v434 = vsub.s32 0, %v433
          %v435 = vrot.slane %v430, %v434
          %v437 = vmul.f32 %v429, %v435
          %v438 = vld [vmem:[%s4] sm:$0x1]
          %v440 = vlaneseq
          %v441 = vshrl.u32 %v440, 7
          %v442 = vsub.s32 0, %v441
          %v443 = vrot.slane %v438, %v442
          %v445 = vadd.f32 %v437, %v443
          %v446 = vpack.c.bf16 %v445, %v445
          %vm447 = vcmask 257024
          %448 = vst.msk [vmem:[#allocation2] sm:$0xf] %vm447, %v446
        $region52: #{tpu_custom_call.1} parent=47 // pred_fallthru
          _
        %v449 = vld [vmem:[#allocation2] sm:$0xf]
        %v450 = vld [vmem:[%s322] sm:$0xf]
        %v451 = vld [vmem:[%s322 + $0x4] sm:$0xf]
        %v452 = vld [vmem:[%s322 + $0x8] sm:$0xf]
        %v453 = vld [vmem:[%s322 + $0xc] sm:$0xf]
        %v454 = vld [vmem:[%s322 + $0x10] sm:$0xf]
        %v455 = vld [vmem:[%s322 + $0x14] sm:$0xf]
        %v456 = vld [vmem:[%s322 + $0x18] sm:$0xf]
        %v457 = vld [vmem:[%s322 + $0x1c] sm:$0xf]
        %v458 = vld [vmem:[%s322 + $0x20] sm:$0xf]
        %v459 = vld [vmem:[%s322 + $0x24] sm:$0xf]
        %v460 = vld [vmem:[%s322 + $0x28] sm:$0xf]
        %v461 = vld [vmem:[%s322 + $0x2c] sm:$0xf]
        %v462 = vld [vmem:[%s322 + $0x30] sm:$0xf]
        %v463 = vld [vmem:[%s322 + $0x34] sm:$0xf]
        %v464 = vld [vmem:[%s322 + $0x38] sm:$0xf]
        %v465 = vld [vmem:[%s322 + $0x3c] sm:$0xf]
        %v466 = vld [vmem:[%s322 + $0x40] sm:$0xf]
        %v467 = vld [vmem:[%s322 + $0x44] sm:$0xf]
        %v468 = vld [vmem:[%s322 + $0x48] sm:$0xf]
        %v469 = vld [vmem:[%s322 + $0x4c] sm:$0xf]
        %v470 = vld [vmem:[%s322 + $0x50] sm:$0xf]
        %v471 = vld [vmem:[%s322 + $0x54] sm:$0xf]
        %v472 = vld [vmem:[%s322 + $0x58] sm:$0xf]
        %v473 = vld [vmem:[%s322 + $0x5c] sm:$0xf]
        %v474 = vld [vmem:[%s322 + $0x60] sm:$0xf]
        %v475 = vld [vmem:[%s322 + $0x64] sm:$0xf]
        %v476 = vld [vmem:[%s322 + $0x68] sm:$0xf]
        %v477 = vld [vmem:[%s322 + $0x6c] sm:$0xf]
        %v478 = vld [vmem:[%s322 + $0x70] sm:$0xf]
        %v479 = vld [vmem:[%s322 + $0x74] sm:$0xf]
        %v480 = vld [vmem:[%s322 + $0x78] sm:$0xf]
        %v481 = vld [vmem:[%s322 + $0x7c] sm:$0xf]
        %v482 = vld [vmem:[%s327] sm:$0x3]
        %v484 = vlaneseq
        %v485 = vshrl.u32 %v484, 7
        %v486 = vsub.s32 0, %v485
        %v487 = vrot.slane %v482, %v486
        %v488 = vlaneseq
        %v489 = vshrl.u32 %v488, 7
        %v490 = vsub.s32 1, %v489
        %v491 = vrot.slane %v482, %v490
        %v526 = vunpack.c.l.b16 %v450
        %v527 = vunpack.c.l.b16 %v451
        %v528 = vunpack.c.l.b16 %v452
        %v529 = vunpack.c.l.b16 %v453
        %v530 = vunpack.c.l.b16 %v454
        %v531 = vunpack.c.l.b16 %v455
        %v532 = vunpack.c.l.b16 %v456
        %v533 = vunpack.c.l.b16 %v457
        %v534 = vunpack.c.l.b16 %v458
        %v535 = vunpack.c.l.b16 %v459
        %v536 = vunpack.c.l.b16 %v460
        %v537 = vunpack.c.l.b16 %v461
        %v538 = vunpack.c.l.b16 %v462
        %v539 = vunpack.c.l.b16 %v463
        %v540 = vunpack.c.l.b16 %v464
        %v541 = vunpack.c.l.b16 %v465
        %v542 = vunpack.c.l.b16 %v466
        %v543 = vunpack.c.l.b16 %v467
        %v544 = vunpack.c.l.b16 %v468
        %v545 = vunpack.c.l.b16 %v469
        %v546 = vunpack.c.l.b16 %v470
        %v547 = vunpack.c.l.b16 %v471
        %v548 = vunpack.c.l.b16 %v472
        %v549 = vunpack.c.l.b16 %v473
        %v550 = vunpack.c.l.b16 %v474
        %v551 = vunpack.c.l.b16 %v475
        %v552 = vunpack.c.l.b16 %v476
        %v553 = vunpack.c.l.b16 %v477
        %v554 = vunpack.c.l.b16 %v478
        %v555 = vunpack.c.l.b16 %v479
        %v556 = vunpack.c.l.b16 %v480
        %v557 = vunpack.c.l.b16 %v481
        %v558 = vpack.c.b16 %v527, %v526
        %v559 = vpack.c.b16 %v529, %v528
        %v560 = vpack.c.b16 %v531, %v530
        %v561 = vpack.c.b16 %v533, %v532
        %v562 = vpack.c.b16 %v535, %v534
        %v563 = vpack.c.b16 %v537, %v536
        %v564 = vpack.c.b16 %v539, %v538
        %v565 = vpack.c.b16 %v541, %v540
        %v566 = vpack.c.b16 %v543, %v542
        %v567 = vpack.c.b16 %v545, %v544
        %v568 = vpack.c.b16 %v547, %v546
        %v569 = vpack.c.b16 %v549, %v548
        %v570 = vpack.c.b16 %v551, %v550
        %v571 = vpack.c.b16 %v553, %v552
        %v572 = vpack.c.b16 %v555, %v554
        %v573 = vpack.c.b16 %v557, %v556
        %vm574 = vcmask 261120
        %v576 = vsel %vm574, %v449, 0
        %v579 = vsel %vm574, %v558, 0
        %v582 = vsel %vm574, %v559, 0
        %v585 = vsel %vm574, %v560, 0
        %v588 = vsel %vm574, %v561, 0
        %v591 = vsel %vm574, %v562, 0
        %v594 = vsel %vm574, %v563, 0
        %v597 = vsel %vm574, %v564, 0
        %v600 = vsel %vm574, %v565, 0
        %v603 = vsel %vm574, %v566, 0
        %v606 = vsel %vm574, %v567, 0
        %v609 = vsel %vm574, %v568, 0
        %v612 = vsel %vm574, %v569, 0
        %v615 = vsel %vm574, %v570, 0
        %v618 = vsel %vm574, %v571, 0
        %v621 = vsel %vm574, %v572, 0
        %v624 = vsel %vm574, %v573, 0
        %626 = vmatprep.subr.bf16.mxu0 0
        %627 = vmatpush1.bf16.xpose.msra.mxu0 %v579
        %628 = vmatprep.subr.bf16.mxu0 0
        %629 = vmatpush1.bf16.xpose.msra.mxu0 %v582
        %630 = vmatprep.subr.bf16.mxu0 0
        %631 = vmatpush1.bf16.xpose.msra.mxu0 %v585
        %632 = vmatprep.subr.bf16.mxu0 0
        %633 = vmatpush1.bf16.xpose.msra.mxu0 %v588
        %634 = vmatprep.subr.bf16.mxu0 0
        %635 = vmatpush1.bf16.xpose.msra.mxu0 %v591
        %636 = vmatprep.subr.bf16.mxu0 0
        %637 = vmatpush1.bf16.xpose.msra.mxu0 %v594
        %638 = vmatprep.subr.bf16.mxu0 0
        %639 = vmatpush1.bf16.xpose.msra.mxu0 %v597
        %640 = vmatprep.subr.bf16.mxu0 0
        %641 = vmatpush1.bf16.xpose.msra.mxu0 %v600
        %642 = vmatprep.subr.bf16.mxu0 0
        %643 = vmatpush1.bf16.xpose.msra.mxu0 %v603
        %644 = vmatprep.subr.bf16.mxu0 0
        %645 = vmatpush1.bf16.xpose.msra.mxu0 %v606
        %646 = vmatprep.subr.bf16.mxu0 0
        %647 = vmatpush1.bf16.xpose.msra.mxu0 %v609
        %648 = vmatprep.subr.bf16.mxu0 0
        %649 = vmatpush1.bf16.xpose.msra.mxu0 %v612
        %650 = vmatprep.subr.bf16.mxu0 0
        %651 = vmatpush1.bf16.xpose.msra.mxu0 %v615
        %652 = vmatprep.subr.bf16.mxu0 0
        %653 = vmatpush1.bf16.xpose.msra.mxu0 %v618
        %654 = vmatprep.subr.bf16.mxu0 0
        %655 = vmatpush1.bf16.xpose.msra.mxu0 %v621
        %656 = vmatprep.subr.bf16.mxu0 0
        %657 = vmatpush1.bf16.xpose.msra.mxu0 %v624
        %658 = vmatprep.mubr.bf16.mxu0 0
        %659 = vmatmul.mubr.bf16.gmra.mrb[0].mxu0 %v576
        %v660 = vpop.f32.mrb[0].mxu0
        %v661 = vadd.f32 %v487, %v660
        %v662 = vpop.f32.mrb[0].mxu0
        %v663 = vadd.f32 %v491, %v662
        %v664 = vpop.f32.mrb[0].mxu0
        %v665 = vpop.f32.mrb[0].mxu0
        %666 = vdwg.mxu0
        %667 = vst [vmem:[%s313] sm:$0xff] %v661
        %668 = vst [vmem:[%s313 + $0x8] sm:$0xff] %v663
        %s669 = sand.u32 %s205, 1
        %s670 = scalar_lea.sflag [#allocation4], %s669
        %s671 = sand.u32 %s205, 1
        %s672 = smul.addr %s671, 16
        %s673 = scalar_lea.vmem [#allocation3], %s672
        // Predicated region
        $region53: #{tpu_custom_call.1} parent=47 // pred_check
          %p674 = pneg %p215
        $region54: #{tpu_custom_call.1} parent=47 // pred_check_branch
          %676 = sbr.rel (%p674) target = $region56
        $region55: #{tpu_custom_call.1} parent=47 // pred_region
          %s677 = smul.u32 2, %s26
          %s679 = ssub.s32 256, 256
          %680 = vsyncadd %s670, %s679
          %s681 = smul.addr %s25, 4
          %s682 = sadd.s32 %s677, %s681
          %s683 = smul.addr %s682, 128
          %s684 = scalar_lea.hbm %s7, %s683
          %s686 = sshll.u32 %s673, 4
          %s687 = int_to_ptr.vmem [resolvable:$true] %s686
          %689 = dma.vmem_to_hbm [thread:$0]  %s687, 256, %s684, %s670
        $region56: #{tpu_custom_call.1} parent=47 // pred_fallthru
          _
      $region48: #{tpu_custom_call.1} parent=5 // pred_fallthru
        _
      %p690 = scmp.le.s32.totalorder 2, %s16
      // Predicated region
      $region57: #{tpu_custom_call.1} parent=5 // pred_check
        %p691 = pneg %p690
      $region58: #{tpu_custom_call.1} parent=5 // pred_check_branch
        %693 = sbr.rel (%p691) target = $region60
      $region59: #{tpu_custom_call.1} parent=5 // pred_region
        %s694 = ssub.s32 %s16, 2
        // Predicated region
        $region61: #{tpu_custom_call.1} parent=59 // pred_check
          %p695 = pneg %p221
        $region62: #{tpu_custom_call.1} parent=59 // pred_check_branch
          %697 = sbr.rel (%p695) target = $region64
        $region63: #{tpu_custom_call.1} parent=59 // pred_region
          %s698 = sand.u32 %s206, 1
          %s699 = scalar_lea.sflag [#allocation4], %s698
          %s700 = sand.u32 %s206, 1
          %s701 = smul.addr %s700, 16
          %s702 = scalar_lea.vmem [#allocation3], %s701
          %703 = dma.done %s699, 256
        $region64: #{tpu_custom_call.1} parent=59 // pred_fallthru
          _
      $region60: #{tpu_custom_call.1} parent=5 // pred_fallthru
        _
    $region6: #{tpu_custom_call.1} parent=1 // loop_footer
      %s20 = sadd.s32 1, %s16
    $region7: #{tpu_custom_call.1} parent=1 // loop_footer_branch
      %15 = sbr.rel target = $region3
    $region8: #{tpu_custom_call.1} parent=1 // loop_exit
      _
    %704 = vsyncpa [#allocation4], 1
    %s705 = scalar_lea.sflag [#allocation4], 1
    %706 = vsyncpa %s705, 1

</llo_original>
